<compile_context>
chip_gen: v5e
topology: v5e:2x2
jax: 0.10.0
libtpu: 0.0.40
codegen_flags: <defaults>
</compile_context>

<pallas_src>
import jax
import jax.numpy as jnp
from jax.experimental import pallas as pl
from jax.experimental.pallas import tpu as pltpu


def _sinusoid_embed_kernel(pos_ref, inv_freq_ref, out_ref):
    # pos_ref      (BN, 1)     int32    flattened position ids (column vector)
    # inv_freq_ref (1, half)   float32  1 / 10000**(2k/dim), resident every step
    # out_ref      (BN, dim)   float32  [:, :half]=sin, [:, half:]=cos
    t = pos_ref[...].astype(jnp.float32)            # VPU cast (free under EUP/store)
    angles = t * inv_freq_ref[...]                  # (BN, half) broadcast multiply (VPU)
    # One full-width, unmasked store per tile (lane-dense for dim that is a
    # multiple of 128; avoids the two mid-vreg masked slice stores).
    out_ref[...] = jnp.concatenate(
        [jnp.sin(angles), jnp.cos(angles)], axis=-1)  # EUP transcendentals


def _round_up(x, m):
    return (x + m - 1) // m * m


def fixed_absolute_positional_embedding(position_ids, dim,
                                        *, target_tile_bytes=2 * 1024 * 1024):
    """JAX/Pallas equivalent of FixedAbsolutePositionalEmbedding(dim)(position_ids)."""
    assert dim % 2 == 0
    half = dim // 2

    # Deterministic "parameter" setup (matches torch __init__):
    inv_freq = 1.0 / (10000.0 ** (jnp.arange(0, dim, 2, dtype=jnp.float32) / dim))
    inv_freq = inv_freq.reshape(1, half)

    orig_shape = position_ids.shape
    pos_flat = position_ids.astype(jnp.int32).reshape(-1, 1)   # (N, 1)
    n = pos_flat.shape[0]

    # Block size: ~2 MiB f32 output tile (multiple of 8 rows), clamped so tiny
    # inputs don't get padded to a huge block.  2 MiB double-buffered stays well
    # under the scoped-VMEM defaults on all generations (incl. v7x's 64 MiB).
    block_n = max(8, (target_tile_bytes // (dim * 4)) // 8 * 8)
    block_n = min(block_n, _round_up(n, 8))
    n_pad = _round_up(n, block_n)
    if n_pad != n:
        pos_flat = jnp.pad(pos_flat, ((0, n_pad - n), (0, 0)))

    grid = (n_pad // block_n,)

    out_tile_bytes = block_n * dim * 4
    pos_tile_bytes = block_n * 4
    vmem_limit = 2 * (out_tile_bytes + pos_tile_bytes) + half * 4 + (1 << 20)
    vmem_limit = int(min(64 * 1024 * 1024, max(vmem_limit, 4 * 1024 * 1024)))

    cost = pl.CostEstimate(
        flops=n_pad * half,                 # the broadcast multiply
        transcendentals=n_pad * dim,        # one sin or cos per output element
        bytes_accessed=n_pad * dim * 4 + n_pad * 4 + half * 4,
    )

    out = pl.pallas_call(
        _sinusoid_embed_kernel,
        out_shape=jax.ShapeDtypeStruct((n_pad, dim), jnp.float32),
        grid=grid,
        in_specs=[
            pl.BlockSpec((block_n, 1), lambda i: (i, 0)),   # position tile
            pl.BlockSpec((1, half), lambda i: (0, 0)),      # inv_freq, resident
        ],
        out_specs=pl.BlockSpec((block_n, dim), lambda i: (i, 0)),
        compiler_params=pltpu.CompilerParams(
            dimension_semantics=("parallel",),   # 2-TC sharding on v7x; harmless elsewhere
            vmem_limit_bytes=vmem_limit,
        ),
        cost_estimate=cost,
    )(pos_flat, inv_freq)

    if n_pad != n:
        out = out[:n]
    return out.reshape(*orig_shape, dim)


def _reference(position_ids, dim):
    # Plain-JAX reference reproducing the torch table-lookup exactly.
    inv_freq = 1.0 / (10000.0 ** (jnp.arange(0, dim, 2, dtype=jnp.float32) / dim))
    t = jnp.arange(16384, dtype=jnp.float32)
    sinusoid = jnp.einsum("i,j->ij", t, inv_freq)
    table = jnp.concatenate([jnp.sin(sinusoid), jnp.cos(sinusoid)], axis=-1)
    return table[position_ids.astype(jnp.int32)]


if __name__ == "__main__":
    dim = 32          # hidden size
    batch, seq = 2, 8
    key = jax.random.PRNGKey(0)
    position_ids = jax.random.randint(key, (batch, seq), 0, 16384, dtype=jnp.int32)

    out = fixed_absolute_positional_embedding(position_ids, dim)
    out = jax.block_until_ready(out)

    ref = _reference(position_ids, dim)
    assert out.shape == (batch, seq, dim), out.shape
    assert out.dtype == jnp.float32
    assert jnp.allclose(out, ref, atol=1e-4, rtol=1e-5)

    print("KERNEL_OK")
</pallas_src>

<mosaic_0001>
module attributes {stable_mosaic.version = 11 : i64} {
  func.func @_sinusoid_embed_kernel(%arg0: i32, %arg1: memref<16x1xi32, #tpu.memory_space<vmem>>, %arg2: memref<1x16xf32, #tpu.memory_space<vmem>>, %arg3: memref<16x32xf32, #tpu.memory_space<vmem>>) attributes {dimension_semantics = [#tpu.dimension_semantics<parallel>], iteration_bounds = array<i64: 1>, scalar_prefetch = 0 : i64, scratch_operands = 0 : i64, tpu.core_type = #tpu.core_type<tc>, window_params = [{transform_indices = @transform_0, window_bounds = array<i64: 16, 1>}, {pipeline_mode = #tpu.pipeline_mode<synchronous>, transform_indices = @transform_1, window_bounds = array<i64: 1, 16>}, {transform_indices = @transform_2, window_bounds = array<i64: 16, 32>}]} {
    %c0 = arith.constant 0 : index
    %c0_0 = arith.constant 0 : index
    %0 = vector.load %arg1[%c0, %c0_0] : memref<16x1xi32, #tpu.memory_space<vmem>>, vector<16x1xi32>
    %1 = arith.sitofp %0 : vector<16x1xi32> to vector<16x1xf32>
    %c0_1 = arith.constant 0 : index
    %c0_2 = arith.constant 0 : index
    %2 = vector.load %arg2[%c0_1, %c0_2] : memref<1x16xf32, #tpu.memory_space<vmem>>, vector<1x16xf32>
    %3 = vector.broadcast %1 : vector<16x1xf32> to vector<16x16xf32>
    %4 = vector.broadcast %2 : vector<1x16xf32> to vector<16x16xf32>
    %5 = arith.mulf %3, %4 : vector<16x16xf32>
    %6 = math.sin %5 : vector<16x16xf32>
    %7 = math.cos %5 : vector<16x16xf32>
    %8 = tpu.concatenate %6, %7 in 1 : vector<16x16xf32>, vector<16x16xf32> -> vector<16x32xf32>
    %c0_3 = arith.constant 0 : index
    %c0_4 = arith.constant 0 : index
    %9 = vector.load %arg3[%c0_3, %c0_4] : memref<16x32xf32, #tpu.memory_space<vmem>>, vector<16x32xf32>
    tpu.vector_store %arg3[%c0_3, %c0_4], %8 {strides = array<i32>} : memref<16x32xf32, #tpu.memory_space<vmem>>, vector<16x32xf32>,
    return
  }
  func.func @transform_0(%arg0: i32) -> (i32, i32) {
    %c0_i32 = arith.constant 0 : i32
    %c0_i32_0 = arith.constant 0 : i32
    return %arg0, %c0_i32 : i32, i32
  }
  func.func @transform_1(%arg0: i32) -> (i32, i32) {
    %c0_i32 = arith.constant 0 : i32
    %c0_i32_0 = arith.constant 0 : i32
    %c0_i32_1 = arith.constant 0 : i32
    return %c0_i32, %c0_i32_0 : i32, i32
  }
  func.func @transform_2(%arg0: i32) -> (i32, i32) {
    %c0_i32 = arith.constant 0 : i32
    %c0_i32_0 = arith.constant 0 : i32
    return %arg0, %c0_i32 : i32, i32
  }
}

</mosaic_0001>

<llo_original>
// kernel: tpu_custom_call.1
$region0: #{tpu_custom_call.1}
  #allocation0 [shape = 'u32[]', space=smem, size = 0x4, offset = 0x4, fixed_abs, tag = 'smem constant byte address 0x4 - core index']
  #allocation1 [shape = 'u32[72,128]{1,0:T(1,128)}', space=vmem, size = 0x9000, scoped, tag = 'internal scratch']
  %s0 = inlined_call_operand.vmem [shape: s32[16,1], index: 0, kind: input, shape index: {}]
  %s1 = inlined_call_operand.vmem [shape: f32[1,16], index: 1, kind: input, shape index: {}]
  %s2 = inlined_call_operand.hbm [shape: f32[16,32], index: 2, kind: output, shape index: {}]
  %s3 = sld [smem:[#allocation0]]
  $region18: #{tpu_custom_call.1} parent=0
    _
  %s5 = ssub.s32 1, %s3
  %s6 = scalar_select 0, %s5, %s3
  $region1: #{tpu_custom_call.1} parent=0
    #allocation2 [shape = 'u8[8192]{0}', space=vmem, size = 0x2000, scoped, tag = 'output window, operand 0, single buffered']
    #allocation3 [shape = 's32[1]{0}', space=sflag, size = 0x4, scoped, tag = 'scoped memory for tpu_custom_call.1']
    %7 = vsyncpa [#allocation3], 0
    // Predicated region
    $region2: #{tpu_custom_call.1} parent=1 // pred_check
      _
    $region3: #{tpu_custom_call.1} parent=1 // pred_check_branch
      %9 = sbr.rel (0) target = $region5
    $region4: #{tpu_custom_call.1} parent=1 // pred_region
      _
    $region5: #{tpu_custom_call.1} parent=1 // pred_fallthru
      _
    // Predicated region
    $region6: #{tpu_custom_call.1} parent=1 // pred_check
      _
    $region7: #{tpu_custom_call.1} parent=1 // pred_check_branch
      %11 = sbr.rel (0) target = $region9
    $region8: #{tpu_custom_call.1} parent=1 // pred_region
      _
    $region9: #{tpu_custom_call.1} parent=1 // pred_fallthru
      _
    %v12 = vld [vmem:[%s0] sm:$0xff]
    %v13 = vld [vmem:[%s0 + $0x8] sm:$0xff]
    %v14 = vcvt.s32.f32 %v12
    %v15 = vcvt.s32.f32 %v13
    %v16 = vld [vmem:[%s1] sm:$0x1]
    %18 = vset.pattern.permute.xlu0 0
    %19 = vperm.xlu0 %18, %v14
    %v20 = vpop.permute.xlu0 %19
    %23 = vset.pattern.permute.xlu0 0
    %24 = vperm.xlu0 %23, %v15
    %v25 = vpop.permute.xlu0 %24
    %v28 = vperm.slane %v16, 0
    %v30 = vmul.f32 %v20, %v28
    %v31 = vmul.f32 %v25, %v28
    %v32 = vand.u32 2147483647, %v30
    %vm33 = vcmp.le.f32.partialorder %v32, 0.7853982
    %vm34 = vcmp.lt.s32.totalorder %v30, 0
    %v35 = vand.u32 %v30, 2139095040
    %v36 = vshrl.u32 %v35, 23
    %v37 = vsub.s32 %v36, 127
    %v38 = vand.u32 2147483647, %v30
    %v39 = vand.u32 %v38, 8388607
    %v40 = vor.u32 %v39, 8388608
    %v41 = vsub.s32 0, %v40
    %v42 = vadd.s32 %v37, 1
    %vm43 = vcmp.gt.s32.totalorder %v42, 0
    %v44 = vsel %vm43, %v42, 0
    %v45 = vshrl.u32 %v44, 5
    %v46 = vand.u32 %v44, 31
    %v47 = vsub.s32 32, %v46
    %v48 = vshrl.u32 683565275, %v47
    %v49 = vshll.u32 683565275, %v46
    %v50 = vshrl.u32 2475754826, %v47
    %v51 = vor.u32 %v49, %v50
    %v52 = vshll.u32 2475754826, %v46
    %v53 = vshrl.u32 2131351028, %v47
    %v54 = vor.u32 %v52, %v53
    %v55 = vshll.u32 2131351028, %v46
    %v56 = vshrl.u32 2102212464, %v47
    %v57 = vor.u32 %v55, %v56
    %v58 = vshll.u32 2102212464, %v46
    %v59 = vshrl.u32 920167782, %v47
    %v60 = vor.u32 %v58, %v59
    %v61 = vshll.u32 920167782, %v46
    %v62 = vshrl.u32 1326507024, %v47
    %v63 = vor.u32 %v61, %v62
    %vm64 = vcmp.lt.s32.totalorder %v45, 1
    %vm65 = vcmp.lt.s32.totalorder %v45, 2
    %vm66 = vcmp.lt.s32.totalorder %v45, 3
    %vm67 = vcmp.lt.s32.totalorder %v45, 4
    %v68 = vsel %vm64, %v48, %v51
    %v69 = vsel %vm67, %v57, 2102212464
    %v70 = vsel %vm66, %v54, %v69
    %v71 = vsel %vm65, %v68, %v70
    %v72 = vsel %vm64, %v51, %v54
    %v73 = vsel %vm67, %v60, 920167782
    %v74 = vsel %vm66, %v57, %v73
    %v75 = vsel %vm65, %v72, %v74
    %v76 = vsel %vm64, %v54, %v57
    %v77 = vsel %vm67, %v63, 1326507024
    %v78 = vsel %vm66, %v60, %v77
    %v79 = vsel %vm65, %v76, %v78
    %v80 = vshll.u32 %v40, 8
    %v81 = vand.u32 %v80, 65535
    %v82 = vshrl.u32 %v80, 16
    %v83 = vand.u32 %v79, 65535
    %v84 = vshrl.u32 %v79, 16
    %v85 = vmul.u32 %v81, %v83
    %v86 = vmul.u32 %v81, %v84
    %v87 = vmul.u32 %v82, %v83
    %v88 = vmul.u32 %v82, %v84
    %v89 = vshll.u32 %v86, 16
    %v90 = vshrl.u32 %v86, 16
    %v91 = vshll.u32 %v87, 16
    %v92 = vshrl.u32 %v87, 16
    %vm93 = vc.u32 %v85, %v89
    %v94 = vsel %vm93, 1, 0
    %v95 = vadd.s32 %v85, %v89
    %v96 = vadd.s32 %v88, %v94
    %vm97 = vc.u32 %v95, %v91
    %v98 = vsel %vm97, 1, 0
    %v99 = vadd.s32 %v95, %v91
    %v100 = vadd.s32 %v96, %v98
    %v101 = vadd.s32 %v100, %v90
    %v102 = vadd.s32 %v101, %v92
    %v103 = vand.u32 %v80, 65535
    %v104 = vshrl.u32 %v80, 16
    %v105 = vand.u32 %v75, 65535
    %v106 = vshrl.u32 %v75, 16
    %v107 = vmul.u32 %v103, %v105
    %v108 = vmul.u32 %v103, %v106
    %v109 = vmul.u32 %v104, %v105
    %v110 = vmul.u32 %v104, %v106
    %v111 = vshll.u32 %v108, 16
    %v112 = vshrl.u32 %v108, 16
    %v113 = vshll.u32 %v109, 16
    %v114 = vshrl.u32 %v109, 16
    %vm115 = vc.u32 %v107, %v111
    %v116 = vsel %vm115, 1, 0
    %v117 = vadd.s32 %v107, %v111
    %v118 = vadd.s32 %v110, %v116
    %vm119 = vc.u32 %v117, %v113
    %v120 = vsel %vm119, 1, 0
    %v121 = vadd.s32 %v117, %v113
    %v122 = vadd.s32 %v118, %v120
    %v123 = vadd.s32 %v122, %v112
    %v124 = vadd.s32 %v123, %v114
    %v125 = vmul.u32 %v80, %v71
    %v126 = vadd.s32 %v102, %v121
    %vm127 = vc.u32 %v102, %v121
    %v128 = vadd.s32 %v124, 1
    %v129 = vsel %vm127, %v128, %v124
    %v130 = vadd.s32 %v125, %v129
    %v131 = vadd.s32 %v130, 536870912
    %v132 = vshrl.u32 %v131, 30
    %v133 = vshll.u32 %v132, 30
    %v134 = vsub.s32 %v130, %v133
    %vm135 = vcmp.lt.s32.totalorder %v134, 0
    %v136 = vsub.s32 0, %v134
    %v137 = vsel %vm135, %v136, %v134
    %v138 = vclz %v137
    %v139 = vsub.s32 %v138, 2
    %vm140 = vcmp.gt.s32.totalorder 0, %v139
    %v141 = vsel %vm140, 0, %v139
    %v142 = vsub.s32 32, %v141
    %v143 = vshll.u32 %v134, %v141
    %v144 = vshrl.u32 %v126, %v142
    %v145 = vor.u32 %v143, %v144
    %v146 = vsub.s32 4294967266, %v141
    %v147 = vadd.s32 %v146, 127
    %v148 = vshll.u32 %v147, 23
    %v149 = vor.u32 4788187, %v148
    %v150 = vand.u32 2147483647, %v149
    %v152 = vcvt.s32.f32 %v145
    %v153 = vmul.f32 %v152, %v150
    %v154 = vxor.u32 %v153, 2147483648
    %v155 = vsel %vm34, %v154, %v153
    %v156 = vsub.s32 4, %v132
    %v157 = vsel %vm34, %v156, %v132
    %v158 = vsel %vm33, %v30, %v155
    %v159 = vsel %vm33, 0, %v157
    %v160 = vmul.f32 %v158, %v158
    %v161 = vmul.f32 %v160, -0.001358992
    %v162 = vadd.f32 %v161, 0.041655596
    %v163 = vmul.f32 %v160, %v162
    %v164 = vadd.f32 %v163, -0.4999988
    %v165 = vmul.f32 %v160, %v164
    %v166 = vadd.f32 1.0, %v165
    %v167 = vmul.f32 %v158, %v158
    %v168 = vmul.f32 %v167, -0.00019511016
    %v169 = vadd.f32 %v168, 0.008332121
    %v170 = vmul.f32 %v167, %v169
    %v171 = vadd.f32 %v170, -0.16666654
    %v172 = vmul.f32 %v167, %v171
    %v173 = vadd.f32 %v172, 1.0
    %v174 = vmul.f32 %v173, %v158
    %vm175 = vweird.f32 %v30
    %v176 = vadd.s32 %v159, 3
    %v177 = vand.u32 %v176, 3
    %vm178 = vcmp.lt.s32.totalorder %v177, 2
    %vm179 = vcmp.eq.s32.totalorder %v177, 0
    %v180 = vxor.u32 %v174, 2147483648
    %v181 = vsel %vm179, %v166, %v180
    %vm182 = vcmp.eq.s32.totalorder %v177, 2
    %v183 = vxor.u32 %v166, 2147483648
    %v184 = vsel %vm182, %v183, %v174
    %v185 = vsel %vm178, %v181, %v184
    %v186 = vsel %vm175, nan, %v185
    %v187 = vand.u32 2147483647, %v31
    %vm188 = vcmp.le.f32.partialorder %v187, 0.7853982
    %vm189 = vcmp.lt.s32.totalorder %v31, 0
    %v190 = vand.u32 %v31, 2139095040
    %v191 = vshrl.u32 %v190, 23
    %v192 = vsub.s32 %v191, 127
    %v193 = vand.u32 2147483647, %v31
    %v194 = vand.u32 %v193, 8388607
    %v195 = vor.u32 %v194, 8388608
    %v196 = vsub.s32 0, %v195
    %v197 = vadd.s32 %v192, 1
    %vm198 = vcmp.gt.s32.totalorder %v197, 0
    %v199 = vsel %vm198, %v197, 0
    %v200 = vshrl.u32 %v199, 5
    %v201 = vand.u32 %v199, 31
    %v202 = vsub.s32 32, %v201
    %v203 = vshrl.u32 683565275, %v202
    %v204 = vshll.u32 683565275, %v201
    %v205 = vshrl.u32 2475754826, %v202
    %v206 = vor.u32 %v204, %v205
    %v207 = vshll.u32 2475754826, %v201
    %v208 = vshrl.u32 2131351028, %v202
    %v209 = vor.u32 %v207, %v208
    %v210 = vshll.u32 2131351028, %v201
    %v211 = vshrl.u32 2102212464, %v202
    %v212 = vor.u32 %v210, %v211
    %v213 = vshll.u32 2102212464, %v201
    %v214 = vshrl.u32 920167782, %v202
    %v215 = vor.u32 %v213, %v214
    %v216 = vshll.u32 920167782, %v201
    %v217 = vshrl.u32 1326507024, %v202
    %v218 = vor.u32 %v216, %v217
    %vm219 = vcmp.lt.s32.totalorder %v200, 1
    %vm220 = vcmp.lt.s32.totalorder %v200, 2
    %vm221 = vcmp.lt.s32.totalorder %v200, 3
    %vm222 = vcmp.lt.s32.totalorder %v200, 4
    %v223 = vsel %vm219, %v203, %v206
    %v224 = vsel %vm222, %v212, 2102212464
    %v225 = vsel %vm221, %v209, %v224
    %v226 = vsel %vm220, %v223, %v225
    %v227 = vsel %vm219, %v206, %v209
    %v228 = vsel %vm222, %v215, 920167782
    %v229 = vsel %vm221, %v212, %v228
    %v230 = vsel %vm220, %v227, %v229
    %v231 = vsel %vm219, %v209, %v212
    %v232 = vsel %vm222, %v218, 1326507024
    %v233 = vsel %vm221, %v215, %v232
    %v234 = vsel %vm220, %v231, %v233
    %v235 = vshll.u32 %v195, 8
    %v236 = vand.u32 %v235, 65535
    %v237 = vshrl.u32 %v235, 16
    %v238 = vand.u32 %v234, 65535
    %v239 = vshrl.u32 %v234, 16
    %v240 = vmul.u32 %v236, %v238
    %v241 = vmul.u32 %v236, %v239
    %v242 = vmul.u32 %v237, %v238
    %v243 = vmul.u32 %v237, %v239
    %v244 = vshll.u32 %v241, 16
    %v245 = vshrl.u32 %v241, 16
    %v246 = vshll.u32 %v242, 16
    %v247 = vshrl.u32 %v242, 16
    %vm248 = vc.u32 %v240, %v244
    %v249 = vsel %vm248, 1, 0
    %v250 = vadd.s32 %v240, %v244
    %v251 = vadd.s32 %v243, %v249
    %vm252 = vc.u32 %v250, %v246
    %v253 = vsel %vm252, 1, 0
    %v254 = vadd.s32 %v250, %v246
    %v255 = vadd.s32 %v251, %v253
    %v256 = vadd.s32 %v255, %v245
    %v257 = vadd.s32 %v256, %v247
    %v258 = vand.u32 %v235, 65535
    %v259 = vshrl.u32 %v235, 16
    %v260 = vand.u32 %v230, 65535
    %v261 = vshrl.u32 %v230, 16
    %v262 = vmul.u32 %v258, %v260
    %v263 = vmul.u32 %v258, %v261
    %v264 = vmul.u32 %v259, %v260
    %v265 = vmul.u32 %v259, %v261
    %v266 = vshll.u32 %v263, 16
    %v267 = vshrl.u32 %v263, 16
    %v268 = vshll.u32 %v264, 16
    %v269 = vshrl.u32 %v264, 16
    %vm270 = vc.u32 %v262, %v266
    %v271 = vsel %vm270, 1, 0
    %v272 = vadd.s32 %v262, %v266
    %v273 = vadd.s32 %v265, %v271
    %vm274 = vc.u32 %v272, %v268
    %v275 = vsel %vm274, 1, 0
    %v276 = vadd.s32 %v272, %v268
    %v277 = vadd.s32 %v273, %v275
    %v278 = vadd.s32 %v277, %v267
    %v279 = vadd.s32 %v278, %v269
    %v280 = vmul.u32 %v235, %v226
    %v281 = vadd.s32 %v257, %v276
    %vm282 = vc.u32 %v257, %v276
    %v283 = vadd.s32 %v279, 1
    %v284 = vsel %vm282, %v283, %v279
    %v285 = vadd.s32 %v280, %v284
    %v286 = vadd.s32 %v285, 536870912
    %v287 = vshrl.u32 %v286, 30
    %v288 = vshll.u32 %v287, 30
    %v289 = vsub.s32 %v285, %v288
    %vm290 = vcmp.lt.s32.totalorder %v289, 0
    %v291 = vsub.s32 0, %v289
    %v292 = vsel %vm290, %v291, %v289
    %v293 = vclz %v292
    %v294 = vsub.s32 %v293, 2
    %vm295 = vcmp.gt.s32.totalorder 0, %v294
    %v296 = vsel %vm295, 0, %v294
    %v297 = vsub.s32 32, %v296
    %v298 = vshll.u32 %v289, %v296
    %v299 = vshrl.u32 %v281, %v297
    %v300 = vor.u32 %v298, %v299
    %v301 = vsub.s32 4294967266, %v296
    %v302 = vadd.s32 %v301, 127
    %v303 = vshll.u32 %v302, 23
    %v304 = vor.u32 4788187, %v303
    %v305 = vand.u32 2147483647, %v304
    %v307 = vcvt.s32.f32 %v300
    %v308 = vmul.f32 %v307, %v305
    %v309 = vxor.u32 %v308, 2147483648
    %v310 = vsel %vm189, %v309, %v308
    %v311 = vsub.s32 4, %v287
    %v312 = vsel %vm189, %v311, %v287
    %v313 = vsel %vm188, %v31, %v310
    %v314 = vsel %vm188, 0, %v312
    %v315 = vmul.f32 %v313, %v313
    %v316 = vmul.f32 %v315, -0.001358992
    %v317 = vadd.f32 %v316, 0.041655596
    %v318 = vmul.f32 %v315, %v317
    %v319 = vadd.f32 %v318, -0.4999988
    %v320 = vmul.f32 %v315, %v319
    %v321 = vadd.f32 1.0, %v320
    %v322 = vmul.f32 %v313, %v313
    %v323 = vmul.f32 %v322, -0.00019511016
    %v324 = vadd.f32 %v323, 0.008332121
    %v325 = vmul.f32 %v322, %v324
    %v326 = vadd.f32 %v325, -0.16666654
    %v327 = vmul.f32 %v322, %v326
    %v328 = vadd.f32 %v327, 1.0
    %v329 = vmul.f32 %v328, %v313
    %vm330 = vweird.f32 %v31
    %v331 = vadd.s32 %v314, 3
    %v332 = vand.u32 %v331, 3
    %vm333 = vcmp.lt.s32.totalorder %v332, 2
    %vm334 = vcmp.eq.s32.totalorder %v332, 0
    %v335 = vxor.u32 %v329, 2147483648
    %v336 = vsel %vm334, %v321, %v335
    %vm337 = vcmp.eq.s32.totalorder %v332, 2
    %v338 = vxor.u32 %v321, 2147483648
    %v339 = vsel %vm337, %v338, %v329
    %v340 = vsel %vm333, %v336, %v339
    %v341 = vsel %vm330, nan, %v340
    %v342 = vand.u32 2147483647, %v30
    %vm343 = vcmp.le.f32.partialorder %v342, 0.7853982
    %vm344 = vcmp.lt.s32.totalorder %v30, 0
    %v345 = vand.u32 %v30, 2139095040
    %v346 = vshrl.u32 %v345, 23
    %v347 = vsub.s32 %v346, 127
    %v348 = vand.u32 2147483647, %v30
    %v349 = vand.u32 %v348, 8388607
    %v350 = vor.u32 %v349, 8388608
    %v351 = vsub.s32 0, %v350
    %v352 = vadd.s32 %v347, 1
    %vm353 = vcmp.gt.s32.totalorder %v352, 0
    %v354 = vsel %vm353, %v352, 0
    %v355 = vshrl.u32 %v354, 5
    %v356 = vand.u32 %v354, 31
    %v357 = vsub.s32 32, %v356
    %v358 = vshrl.u32 683565275, %v357
    %v359 = vshll.u32 683565275, %v356
    %v360 = vshrl.u32 2475754826, %v357
    %v361 = vor.u32 %v359, %v360
    %v362 = vshll.u32 2475754826, %v356
    %v363 = vshrl.u32 2131351028, %v357
    %v364 = vor.u32 %v362, %v363
    %v365 = vshll.u32 2131351028, %v356
    %v366 = vshrl.u32 2102212464, %v357
    %v367 = vor.u32 %v365, %v366
    %v368 = vshll.u32 2102212464, %v356
    %v369 = vshrl.u32 920167782, %v357
    %v370 = vor.u32 %v368, %v369
    %v371 = vshll.u32 920167782, %v356
    %v372 = vshrl.u32 1326507024, %v357
    %v373 = vor.u32 %v371, %v372
    %vm374 = vcmp.lt.s32.totalorder %v355, 1
    %vm375 = vcmp.lt.s32.totalorder %v355, 2
    %vm376 = vcmp.lt.s32.totalorder %v355, 3
    %vm377 = vcmp.lt.s32.totalorder %v355, 4
    %v378 = vsel %vm374, %v358, %v361
    %v379 = vsel %vm377, %v367, 2102212464
    %v380 = vsel %vm376, %v364, %v379
    %v381 = vsel %vm375, %v378, %v380
    %v382 = vsel %vm374, %v361, %v364
    %v383 = vsel %vm377, %v370, 920167782
    %v384 = vsel %vm376, %v367, %v383
    %v385 = vsel %vm375, %v382, %v384
    %v386 = vsel %vm374, %v364, %v367
    %v387 = vsel %vm377, %v373, 1326507024
    %v388 = vsel %vm376, %v370, %v387
    %v389 = vsel %vm375, %v386, %v388
    %v390 = vshll.u32 %v350, 8
    %v391 = vand.u32 %v390, 65535
    %v392 = vshrl.u32 %v390, 16
    %v393 = vand.u32 %v389, 65535
    %v394 = vshrl.u32 %v389, 16
    %v395 = vmul.u32 %v391, %v393
    %v396 = vmul.u32 %v391, %v394
    %v397 = vmul.u32 %v392, %v393
    %v398 = vmul.u32 %v392, %v394
    %v399 = vshll.u32 %v396, 16
    %v400 = vshrl.u32 %v396, 16
    %v401 = vshll.u32 %v397, 16
    %v402 = vshrl.u32 %v397, 16
    %vm403 = vc.u32 %v395, %v399
    %v404 = vsel %vm403, 1, 0
    %v405 = vadd.s32 %v395, %v399
    %v406 = vadd.s32 %v398, %v404
    %vm407 = vc.u32 %v405, %v401
    %v408 = vsel %vm407, 1, 0
    %v409 = vadd.s32 %v405, %v401
    %v410 = vadd.s32 %v406, %v408
    %v411 = vadd.s32 %v410, %v400
    %v412 = vadd.s32 %v411, %v402
    %v413 = vand.u32 %v390, 65535
    %v414 = vshrl.u32 %v390, 16
    %v415 = vand.u32 %v385, 65535
    %v416 = vshrl.u32 %v385, 16
    %v417 = vmul.u32 %v413, %v415
    %v418 = vmul.u32 %v413, %v416
    %v419 = vmul.u32 %v414, %v415
    %v420 = vmul.u32 %v414, %v416
    %v421 = vshll.u32 %v418, 16
    %v422 = vshrl.u32 %v418, 16
    %v423 = vshll.u32 %v419, 16
    %v424 = vshrl.u32 %v419, 16
    %vm425 = vc.u32 %v417, %v421
    %v426 = vsel %vm425, 1, 0
    %v427 = vadd.s32 %v417, %v421
    %v428 = vadd.s32 %v420, %v426
    %vm429 = vc.u32 %v427, %v423
    %v430 = vsel %vm429, 1, 0
    %v431 = vadd.s32 %v427, %v423
    %v432 = vadd.s32 %v428, %v430
    %v433 = vadd.s32 %v432, %v422
    %v434 = vadd.s32 %v433, %v424
    %v435 = vmul.u32 %v390, %v381
    %v436 = vadd.s32 %v412, %v431
    %vm437 = vc.u32 %v412, %v431
    %v438 = vadd.s32 %v434, 1
    %v439 = vsel %vm437, %v438, %v434
    %v440 = vadd.s32 %v435, %v439
    %v441 = vadd.s32 %v440, 536870912
    %v442 = vshrl.u32 %v441, 30
    %v443 = vshll.u32 %v442, 30
    %v444 = vsub.s32 %v440, %v443
    %vm445 = vcmp.lt.s32.totalorder %v444, 0
    %v446 = vsub.s32 0, %v444
    %v447 = vsel %vm445, %v446, %v444
    %v448 = vclz %v447
    %v449 = vsub.s32 %v448, 2
    %vm450 = vcmp.gt.s32.totalorder 0, %v449
    %v451 = vsel %vm450, 0, %v449
    %v452 = vsub.s32 32, %v451
    %v453 = vshll.u32 %v444, %v451
    %v454 = vshrl.u32 %v436, %v452
    %v455 = vor.u32 %v453, %v454
    %v456 = vsub.s32 4294967266, %v451
    %v457 = vadd.s32 %v456, 127
    %v458 = vshll.u32 %v457, 23
    %v459 = vor.u32 4788187, %v458
    %v460 = vand.u32 2147483647, %v459
    %v462 = vcvt.s32.f32 %v455
    %v463 = vmul.f32 %v462, %v460
    %v464 = vxor.u32 %v463, 2147483648
    %v465 = vsel %vm344, %v464, %v463
    %v466 = vsub.s32 4, %v442
    %v467 = vsel %vm344, %v466, %v442
    %v468 = vsel %vm343, %v30, %v465
    %v469 = vsel %vm343, 0, %v467
    %v470 = vmul.f32 %v468, %v468
    %v471 = vmul.f32 %v470, -0.001358992
    %v472 = vadd.f32 %v471, 0.041655596
    %v473 = vmul.f32 %v470, %v472
    %v474 = vadd.f32 %v473, -0.4999988
    %v475 = vmul.f32 %v470, %v474
    %v476 = vadd.f32 1.0, %v475
    %v477 = vmul.f32 %v468, %v468
    %v478 = vmul.f32 %v477, -0.00019511016
    %v479 = vadd.f32 %v478, 0.008332121
    %v480 = vmul.f32 %v477, %v479
    %v481 = vadd.f32 %v480, -0.16666654
    %v482 = vmul.f32 %v477, %v481
    %v483 = vadd.f32 %v482, 1.0
    %v484 = vmul.f32 %v483, %v468
    %vm485 = vweird.f32 %v30
    %v486 = vand.u32 %v469, 3
    %vm487 = vcmp.lt.s32.totalorder %v486, 2
    %vm488 = vcmp.eq.s32.totalorder %v486, 0
    %v489 = vxor.u32 %v484, 2147483648
    %v490 = vsel %vm488, %v476, %v489
    %vm491 = vcmp.eq.s32.totalorder %v486, 2
    %v492 = vxor.u32 %v476, 2147483648
    %v493 = vsel %vm491, %v492, %v484
    %v494 = vsel %vm487, %v490, %v493
    %v495 = vsel %vm485, nan, %v494
    %v496 = vand.u32 2147483647, %v31
    %vm497 = vcmp.le.f32.partialorder %v496, 0.7853982
    %vm498 = vcmp.lt.s32.totalorder %v31, 0
    %v499 = vand.u32 %v31, 2139095040
    %v500 = vshrl.u32 %v499, 23
    %v501 = vsub.s32 %v500, 127
    %v502 = vand.u32 2147483647, %v31
    %v503 = vand.u32 %v502, 8388607
    %v504 = vor.u32 %v503, 8388608
    %v505 = vsub.s32 0, %v504
    %v506 = vadd.s32 %v501, 1
    %vm507 = vcmp.gt.s32.totalorder %v506, 0
    %v508 = vsel %vm507, %v506, 0
    %v509 = vshrl.u32 %v508, 5
    %v510 = vand.u32 %v508, 31
    %v511 = vsub.s32 32, %v510
    %v512 = vshrl.u32 683565275, %v511
    %v513 = vshll.u32 683565275, %v510
    %v514 = vshrl.u32 2475754826, %v511
    %v515 = vor.u32 %v513, %v514
    %v516 = vshll.u32 2475754826, %v510
    %v517 = vshrl.u32 2131351028, %v511
    %v518 = vor.u32 %v516, %v517
    %v519 = vshll.u32 2131351028, %v510
    %v520 = vshrl.u32 2102212464, %v511
    %v521 = vor.u32 %v519, %v520
    %v522 = vshll.u32 2102212464, %v510
    %v523 = vshrl.u32 920167782, %v511
    %v524 = vor.u32 %v522, %v523
    %v525 = vshll.u32 920167782, %v510
    %v526 = vshrl.u32 1326507024, %v511
    %v527 = vor.u32 %v525, %v526
    %vm528 = vcmp.lt.s32.totalorder %v509, 1
    %vm529 = vcmp.lt.s32.totalorder %v509, 2
    %vm530 = vcmp.lt.s32.totalorder %v509, 3
    %vm531 = vcmp.lt.s32.totalorder %v509, 4
    %v532 = vsel %vm528, %v512, %v515
    %v533 = vsel %vm531, %v521, 2102212464
    %v534 = vsel %vm530, %v518, %v533
    %v535 = vsel %vm529, %v532, %v534
    %v536 = vsel %vm528, %v515, %v518
    %v537 = vsel %vm531, %v524, 920167782
    %v538 = vsel %vm530, %v521, %v537
    %v539 = vsel %vm529, %v536, %v538
    %v540 = vsel %vm528, %v518, %v521
    %v541 = vsel %vm531, %v527, 1326507024
    %v542 = vsel %vm530, %v524, %v541
    %v543 = vsel %vm529, %v540, %v542
    %v544 = vshll.u32 %v504, 8
    %v545 = vand.u32 %v544, 65535
    %v546 = vshrl.u32 %v544, 16
    %v547 = vand.u32 %v543, 65535
    %v548 = vshrl.u32 %v543, 16
    %v549 = vmul.u32 %v545, %v547
    %v550 = vmul.u32 %v545, %v548
    %v551 = vmul.u32 %v546, %v547
    %v552 = vmul.u32 %v546, %v548
    %v553 = vshll.u32 %v550, 16
    %v554 = vshrl.u32 %v550, 16
    %v555 = vshll.u32 %v551, 16
    %v556 = vshrl.u32 %v551, 16
    %vm557 = vc.u32 %v549, %v553
    %v558 = vsel %vm557, 1, 0
    %v559 = vadd.s32 %v549, %v553
    %v560 = vadd.s32 %v552, %v558
    %vm561 = vc.u32 %v559, %v555
    %v562 = vsel %vm561, 1, 0
    %v563 = vadd.s32 %v559, %v555
    %v564 = vadd.s32 %v560, %v562
    %v565 = vadd.s32 %v564, %v554
    %v566 = vadd.s32 %v565, %v556
    %v567 = vand.u32 %v544, 65535
    %v568 = vshrl.u32 %v544, 16
    %v569 = vand.u32 %v539, 65535
    %v570 = vshrl.u32 %v539, 16
    %v571 = vmul.u32 %v567, %v569
    %v572 = vmul.u32 %v567, %v570
    %v573 = vmul.u32 %v568, %v569
    %v574 = vmul.u32 %v568, %v570
    %v575 = vshll.u32 %v572, 16
    %v576 = vshrl.u32 %v572, 16
    %v577 = vshll.u32 %v573, 16
    %v578 = vshrl.u32 %v573, 16
    %vm579 = vc.u32 %v571, %v575
    %v580 = vsel %vm579, 1, 0
    %v581 = vadd.s32 %v571, %v575
    %v582 = vadd.s32 %v574, %v580
    %vm583 = vc.u32 %v581, %v577
    %v584 = vsel %vm583, 1, 0
    %v585 = vadd.s32 %v581, %v577
    %v586 = vadd.s32 %v582, %v584
    %v587 = vadd.s32 %v586, %v576
    %v588 = vadd.s32 %v587, %v578
    %v589 = vmul.u32 %v544, %v535
    %v590 = vadd.s32 %v566, %v585
    %vm591 = vc.u32 %v566, %v585
    %v592 = vadd.s32 %v588, 1
    %v593 = vsel %vm591, %v592, %v588
    %v594 = vadd.s32 %v589, %v593
    %v595 = vadd.s32 %v594, 536870912
    %v596 = vshrl.u32 %v595, 30
    %v597 = vshll.u32 %v596, 30
    %v598 = vsub.s32 %v594, %v597
    %vm599 = vcmp.lt.s32.totalorder %v598, 0
    %v600 = vsub.s32 0, %v598
    %v601 = vsel %vm599, %v600, %v598
    %v602 = vclz %v601
    %v603 = vsub.s32 %v602, 2
    %vm604 = vcmp.gt.s32.totalorder 0, %v603
    %v605 = vsel %vm604, 0, %v603
    %v606 = vsub.s32 32, %v605
    %v607 = vshll.u32 %v598, %v605
    %v608 = vshrl.u32 %v590, %v606
    %v609 = vor.u32 %v607, %v608
    %v610 = vsub.s32 4294967266, %v605
    %v611 = vadd.s32 %v610, 127
    %v612 = vshll.u32 %v611, 23
    %v613 = vor.u32 4788187, %v612
    %v614 = vand.u32 2147483647, %v613
    %v616 = vcvt.s32.f32 %v609
    %v617 = vmul.f32 %v616, %v614
    %v618 = vxor.u32 %v617, 2147483648
    %v619 = vsel %vm498, %v618, %v617
    %v620 = vsub.s32 4, %v596
    %v621 = vsel %vm498, %v620, %v596
    %v622 = vsel %vm497, %v31, %v619
    %v623 = vsel %vm497, 0, %v621
    %v624 = vmul.f32 %v622, %v622
    %v625 = vmul.f32 %v624, -0.001358992
    %v626 = vadd.f32 %v625, 0.041655596
    %v627 = vmul.f32 %v624, %v626
    %v628 = vadd.f32 %v627, -0.4999988
    %v629 = vmul.f32 %v624, %v628
    %v630 = vadd.f32 1.0, %v629
    %v631 = vmul.f32 %v622, %v622
    %v632 = vmul.f32 %v631, -0.00019511016
    %v633 = vadd.f32 %v632, 0.008332121
    %v634 = vmul.f32 %v631, %v633
    %v635 = vadd.f32 %v634, -0.16666654
    %v636 = vmul.f32 %v631, %v635
    %v637 = vadd.f32 %v636, 1.0
    %v638 = vmul.f32 %v637, %v622
    %vm639 = vweird.f32 %v31
    %v640 = vand.u32 %v623, 3
    %vm641 = vcmp.lt.s32.totalorder %v640, 2
    %vm642 = vcmp.eq.s32.totalorder %v640, 0
    %v643 = vxor.u32 %v638, 2147483648
    %v644 = vsel %vm642, %v630, %v643
    %vm645 = vcmp.eq.s32.totalorder %v640, 2
    %v646 = vxor.u32 %v630, 2147483648
    %v647 = vsel %vm645, %v646, %v638
    %v648 = vsel %vm641, %v644, %v647
    %v649 = vsel %vm639, nan, %v648
    %652 = vrot.lane.b32.xlu0 %v495, 16
    %v653 = vpop.permute.xlu0 %652
    %654 = vrot.lane.b32.xlu0 %v649, 16
    %v655 = vpop.permute.xlu0 %654
    %vm658 = vcmask 130048
    %v659 = vsel %vm658, %v186, %v653
    %v660 = vsel %vm658, %v341, %v655
    %vm661 = vcmask 261120
    %662 = vst.msk [vmem:[#allocation2] sm:$0xff] %vm661, %v659
    %663 = vst.msk [vmem:[#allocation2 + $0x8] sm:$0xff] %vm661, %v660
    // Predicated region
    $region10: #{tpu_custom_call.1} parent=1 // pred_check
      _
    $region11: #{tpu_custom_call.1} parent=1 // pred_check_branch
      %665 = sbr.rel (0) target = $region13
    $region12: #{tpu_custom_call.1} parent=1 // pred_region
      %667 = vsyncadd [#allocation3], 0
      %s668 = sshll.u32 [#allocation2], 4
      %s669 = int_to_ptr.vmem [resolvable:$true] %s668
      %s670 = sshll.u32 %s2, 4
      %s671 = int_to_ptr.hbm [resolvable:$true] %s670
      %676 = dma.vmem_to_hbm [thread:$0]  %s669, 256, %s671, [#allocation3], 128, 128, 8
    $region13: #{tpu_custom_call.1} parent=1 // pred_fallthru
      _
    // Predicated region
    $region14: #{tpu_custom_call.1} parent=1 // pred_check
      _
    $region15: #{tpu_custom_call.1} parent=1 // pred_check_branch
      %678 = sbr.rel (0) target = $region17
    $region16: #{tpu_custom_call.1} parent=1 // pred_region
      %680 = dma.done [#allocation3], 256
    $region17: #{tpu_custom_call.1} parent=1 // pred_fallthru
      _
    %681 = vsyncpa [#allocation3], 1

</llo_original>
